<compile_context>
chip_gen: v6e
topology: v6e:2x2x1
jax: 0.10.0
libtpu: 0.0.40
codegen_flags: <defaults>
</compile_context>

<pallas_src>
import functools

import jax
import jax.numpy as jnp
import numpy as np
from jax.experimental import pallas as pl
from jax.experimental.pallas import tpu as pltpu

LN_EPS = 1e-5  # torch.nn.LayerNorm default


def _round_up(x, m):
    return ((x + m - 1) // m) * m


def _make_kernel(C, R_in, E, E_pad, R_out, R_pad, c8):
    """Kernel closure. E is the un-padded embed_dim used for LN statistics."""
    inv_e = 1.0 / float(E)
    W = 2 * E_pad  # width of the fused embedding slab  [r_emb | c_emb]

    def kernel(c_ref, m_ref, r_ref, wemb_ref, wout_ref, pp_ref, out_ref):
        # Packed small params (single DMA):
        #   row 0: [br | bc+bci]   row 1: [ln_g | ln_g]   row 2: [ln_b | ln_b]
        #   row 3: fused output bias
        b_emb = pp_ref[0:1, :W]
        gamma2 = pp_ref[1:2, :W]
        beta2 = pp_ref[2:3, :W]
        b_out = pp_ref[3:4, :R_pad]

        concepts = c_ref[...].astype(jnp.float32)
        ivs = m_ref[...].astype(jnp.float32)
        # Exact `concepts * ~intervention_idxs.bool()` / `concepts * intervention_idxs`.
        non_int = jnp.where(ivs == 0.0, concepts, 0.0)
        intervene = concepts * ivs
        res = r_ref[...].astype(jnp.float32)

        mm = wemb_ref.dtype  # f32 (exact) or bf16 (MXU-native) matmul operands
        # Fused embedding slab: emb = [r_emb | c_emb]; padded lanes are exactly 0
        # (padded weight columns / bias lanes are 0), so lane sums over W equal sums
        # over the true E per half.
        emb = (
            jnp.dot(non_int.astype(mm), wemb_ref[0:C, :],
                    preferred_element_type=jnp.float32)
            + jnp.dot(intervene.astype(mm), wemb_ref[c8:c8 + C, :],
                      preferred_element_type=jnp.float32)
            + jnp.dot(res.astype(mm), wemb_ref[2 * c8:2 * c8 + R_in, :],
                      preferred_element_type=jnp.float32)
            + b_emb
        )

        # Per-half LayerNorm via lane-masked statistics (no concat, no slicing).
        lane = jax.lax.broadcasted_iota(jnp.int32, emb.shape, 1)
        left = lane < E_pad                       # left half = r_emb, right = c_emb
        emb_l = jnp.where(left, emb, 0.0)
        emb_r = emb - emb_l
        s_l = jnp.sum(emb_l, axis=-1, keepdims=True)
        s_r = jnp.sum(emb_r, axis=-1, keepdims=True)
        q_l = jnp.sum(emb_l * emb_l, axis=-1, keepdims=True)
        q_r = jnp.sum(emb_r * emb_r, axis=-1, keepdims=True)
        mean_l = s_l * inv_e
        mean_r = s_r * inv_e
        inv_l = jax.lax.rsqrt(q_l * inv_e - mean_l * mean_l + LN_EPS)
        inv_r = jax.lax.rsqrt(q_r * inv_e - mean_r * mean_r + LN_EPS)
        mean_map = jnp.where(left, mean_l, mean_r)
        inv_map = jnp.where(left, inv_l, inv_r)
        rc = (emb - mean_map) * inv_map * gamma2 + beta2   # [r_norm | c_norm], padded lanes 0

        # Single-key attention => softmax == 1, so V-proj + out-proj + scale + proj
        # fold into one K = 2*E_pad matmul against [W_res ; W_attn].
        out = jnp.dot(rc.astype(mm), wout_ref[...],
                      preferred_element_type=jnp.float32) + b_out   # (TB, R_pad)
        out_ref[...] = out[:, :R_out].astype(out_ref.dtype)

    return kernel


def init_params(key, input_dim_c, input_dim_r, embed_dim):
    """Deterministic synthetic init mirroring the module's parameter shapes
    (PyTorch convention: Linear weight is (out_features, in_features))."""
    ks = jax.random.split(key, 8)

    def lin(k, fan_out, fan_in):
        bound = 1.0 / (fan_in ** 0.5)
        kw, kb = jax.random.split(k)
        w = jax.random.uniform(kw, (fan_out, fan_in), jnp.float32, -bound, bound)
        b = jax.random.uniform(kb, (fan_out,), jnp.float32, -bound, bound)
        return w, b

    p = {}
    p["wc"], p["bc"] = lin(ks[0], embed_dim, input_dim_c)
    p["wci"], p["bci"] = lin(ks[1], embed_dim, input_dim_c)
    p["wr"], p["br"] = lin(ks[2], embed_dim, input_dim_r)
    bound = 1.0 / (embed_dim ** 0.5)
    p["in_proj_w"] = jax.random.uniform(ks[3], (3 * embed_dim, embed_dim), jnp.float32, -bound, bound)
    p["in_proj_b"] = jax.random.uniform(ks[4], (3 * embed_dim,), jnp.float32, -bound, bound)
    p["wo"], p["bo"] = lin(ks[5], embed_dim, embed_dim)
    p["ln_g"] = jnp.ones((embed_dim,), jnp.float32)
    p["ln_b"] = jnp.zeros((embed_dim,), jnp.float32)
    p["scale"] = jnp.float32(0.5)
    if embed_dim != input_dim_r:
        p["wp"], p["bp"] = lin(ks[6], input_dim_r, embed_dim)
    else:
        p["wp"] = jnp.eye(embed_dim, dtype=jnp.float32)   # nn.Identity()
        p["bp"] = jnp.zeros((embed_dim,), jnp.float32)
    return p


def prepare_params(params, *, matmul_dtype=jnp.float32):
    """One-time (per parameter set) folding / padding / packing — hoisted out of the
    per-call hot path.  matmul_dtype=jnp.bfloat16 enables the MXU-native operand path."""
    f32 = jnp.float32
    E = params["ln_g"].shape[0]
    C = params["wc"].shape[1]
    R_in = params["wr"].shape[1]
    R_out = params["wp"].shape[0]
    E_pad = _round_up(E, 128)
    R_pad = _round_up(R_out, 128)
    C8 = _round_up(C, 8)
    R8 = _round_up(R_in, 8)
    W = 2 * E_pad
    K_rows = 2 * C8 + R8

    wv = params["in_proj_w"][2 * E:3 * E].astype(f32)   # V slice of packed MHA in-proj (E, E)
    bv = params["in_proj_b"][2 * E:3 * E].astype(f32)
    wo = params["wo"].astype(f32)
    bo = params["bo"].astype(f32)
    wp_t = params["wp"].T.astype(f32)                   # (E, R_out)
    bp = params["bp"].astype(f32)
    scale = jnp.asarray(params["scale"], f32)

    # forward-only folding (single-key attention => softmax == 1)
    w_res = wp_t                                        # applied to r_norm
    w_attn = scale * (wv.T @ wo.T @ wp_t)               # applied to c_norm
    b_out = scale * ((bv @ wo.T + bo) @ wp_t) + bp      # (R_out,)

    # Fused embedding weight, row blocks at 8-aligned offsets:
    #   rows [0:C)           Wc.T   -> c half (right lanes)
    #   rows [C8:C8+C)       Wci.T  -> c half
    #   rows [2*C8:2*C8+R_in) Wr.T  -> r half (left lanes)
    w_emb = jnp.zeros((K_rows, W), f32)
    w_emb = w_emb.at[0:C, E_pad:E_pad + E].set(params["wc"].T.astype(f32))
    w_emb = w_emb.at[C8:C8 + C, E_pad:E_pad + E].set(params["wci"].T.astype(f32))
    w_emb = w_emb.at[2 * C8:2 * C8 + R_in, 0:E].set(params["wr"].T.astype(f32))

    # Fused output weight: rows [r_norm | c_norm] -> R_pad columns.
    w_out = jnp.zeros((W, R_pad), f32)
    w_out = w_out.at[0:E, 0:R_out].set(w_res)
    w_out = w_out.at[E_pad:E_pad + E, 0:R_out].set(w_attn)

    # Pack all small vectors into one (8, PW) tile -> a single DMA.
    PW = max(W, R_pad)
    pack = jnp.zeros((8, PW), f32)
    pack = pack.at[0, 0:E].set(params["br"].astype(f32))
    pack = pack.at[0, E_pad:E_pad + E].set((params["bc"] + params["bci"]).astype(f32))
    pack = pack.at[1, 0:E].set(params["ln_g"].astype(f32))
    pack = pack.at[1, E_pad:E_pad + E].set(params["ln_g"].astype(f32))
    pack = pack.at[2, 0:E].set(params["ln_b"].astype(f32))
    pack = pack.at[2, E_pad:E_pad + E].set(params["ln_b"].astype(f32))
    pack = pack.at[3, 0:R_out].set(b_out)

    return {
        "w_emb": w_emb.astype(matmul_dtype),
        "w_out": w_out.astype(matmul_dtype),
        "pack": pack,
        "dims": dict(C=C, C8=C8, R_in=R_in, E=E, E_pad=E_pad, R_out=R_out, R_pad=R_pad),
    }


def cross_attention_forward(prepared, concepts, residuals, intervention_idxs, *, block_b=1024):
    d = prepared["dims"]
    C, C8, R_in = d["C"], d["C8"], d["R_in"]
    E, E_pad, R_out, R_pad = d["E"], d["E_pad"], d["R_out"], d["R_pad"]

    B = concepts.shape[0]
    out_dtype = residuals.dtype

    # Batch tiling: large tiles amortize the ~0.35us/step pipeline overhead, but keep
    # at least 2 tiles when B allows so both v7x TensorCores get work.
    B8 = _round_up(B, 8)
    TB = min(_round_up(block_b, 8), B8)
    if B8 >= 16:
        TB = min(TB, _round_up((B8 + 1) // 2, 8))
    B_pad = _round_up(B, TB)

    def pad_rows(a):
        return a if a.shape[0] == B_pad else jnp.pad(a, ((0, B_pad - a.shape[0]), (0, 0)))

    concepts_p = pad_rows(concepts)
    ivs_p = pad_rows(intervention_idxs.astype(concepts.dtype))
    residuals_p = pad_rows(residuals)

    w_emb, w_out, pack = prepared["w_emb"], prepared["w_out"], prepared["pack"]
    grid = (B_pad // TB,)
    kernel = _make_kernel(C, R_in, E, E_pad, R_out, R_pad, C8)

    def nbytes(shape, dtype):
        return int(np.prod(shape)) * np.dtype(dtype).itemsize

    flops = 2 * B_pad * ((2 * C + R_in) * 2 * E_pad + 2 * E_pad * R_pad)
    bytes_accessed = (
        nbytes((B_pad, 2 * C + R_in), jnp.float32)       # activation inputs
        + nbytes((B_pad, R_out), out_dtype)              # output (un-padded writeback)
        + nbytes(w_emb.shape, w_emb.dtype)
        + nbytes(w_out.shape, w_out.dtype)
        + nbytes(pack.shape, pack.dtype)
    )
    cost = pl.CostEstimate(flops=flops, transcendentals=2 * B_pad, bytes_accessed=bytes_accessed)

    def act_spec(width):
        return pl.BlockSpec((TB, width), lambda i: (i, 0))

    def resident_spec(shape):
        # Full-array block, same block every grid step -> stays resident in VMEM.
        return pl.BlockSpec(shape, lambda i: (0, 0))

    out = pl.pallas_call(
        kernel,
        out_shape=jax.ShapeDtypeStruct((B_pad, R_out), out_dtype),
        grid=grid,
        in_specs=[
            act_spec(C),                   # concepts (raw)
            act_spec(C),                   # intervention_idxs (raw)
            act_spec(R_in),                # residuals (raw)
            resident_spec(w_emb.shape),    # fused embedding weight (row blocks)
            resident_spec(w_out.shape),    # fused output weight [W_res ; W_attn]
            resident_spec(pack.shape),     # packed biases / LN params
        ],
        # (TB, R_out) is legal: last dim equals the full array dim -> 8x smaller HBM
        # writeback than storing the R_pad-wide slab and slicing outside.
        out_specs=pl.BlockSpec((TB, R_out), lambda i: (i, 0)),
        compiler_params=pltpu.CompilerParams(dimension_semantics=("parallel",)),
        cost_estimate=cost,
    )(concepts_p, ivs_p, residuals_p, w_emb, w_out, pack)

    return out[:B]


def reference_forward(params, concepts, residuals, intervention_idxs, num_heads):
    """Pure-JAX reference that keeps the full multi-head attention path."""
    E = params["ln_g"].shape[0]
    B = concepts.shape[0]
    interv = intervention_idxs.astype(concepts.dtype)
    non_int = concepts * (interv == 0.0).astype(concepts.dtype)
    intervene = concepts * interv

    c_emb = non_int @ params["wc"].T + params["bc"] + intervene @ params["wci"].T + params["bci"]
    r_emb = residuals @ params["wr"].T + params["br"]

    def ln(x):
        m = x.mean(-1, keepdims=True)
        v = ((x - m) ** 2).mean(-1, keepdims=True)
        return (x - m) / jnp.sqrt(v + LN_EPS) * params["ln_g"] + params["ln_b"]

    c_norm = ln(c_emb)
    r_norm = ln(r_emb)

    dh = E // num_heads
    wq, wk, wv = jnp.split(params["in_proj_w"], 3, axis=0)
    bq, bk, bv = jnp.split(params["in_proj_b"], 3, axis=0)
    q = (r_norm @ wq.T + bq).reshape(B, num_heads, dh)
    k = (c_norm @ wk.T + bk).reshape(B, num_heads, dh)
    v = (c_norm @ wv.T + bv).reshape(B, num_heads, dh)
    logits = (q * k).sum(-1, keepdims=True) / jnp.sqrt(jnp.float32(dh))   # (B, H, 1): one key
    attn = jax.nn.softmax(logits, axis=-1)                                 # exactly ones
    attended_heads = attn * v                                              # (B, H, dh)
    attended = attended_heads.reshape(B, E) @ params["wo"].T + params["bo"]

    combined = r_norm + params["scale"] * attended
    return combined @ params["wp"].T + params["bp"]


if __name__ == "__main__":
    B, C, R, E, H = 16, 8, 16, 32, 4  # batch, input_dim_c, input_dim_r, embed_dim, num_heads
    key = jax.random.PRNGKey(0)
    kp, kc, kr, ki = jax.random.split(key, 4)

    params = init_params(kp, C, R, E)
    concepts = jax.random.normal(kc, (B, C), jnp.float32)
    residuals = jax.random.normal(kr, (B, R), jnp.float32)
    intervention_idxs = (jax.random.uniform(ki, (B, C)) > 0.5).astype(jnp.float32)

    ref = reference_forward(params, concepts, residuals, intervention_idxs, H)

    # f32 matmul operands: tight-tolerance check against the full-MHA reference.
    prep = prepare_params(params)  # folding/padding/packing done once, outside the hot path
    fwd = jax.jit(functools.partial(cross_attention_forward, prep))
    out = jax.block_until_ready(fwd(concepts, residuals, intervention_idxs))
    assert out.shape == (B, R)
    np.testing.assert_allclose(np.asarray(out), np.asarray(ref), rtol=1e-4, atol=1e-4)

    # bf16 matmul operands (MXU-native path for v6e/v7x): looser tolerance.
    prep_bf16 = prepare_params(params, matmul_dtype=jnp.bfloat16)
    fwd_bf16 = jax.jit(functools.partial(cross_attention_forward, prep_bf16))
    out_bf16 = jax.block_until_ready(fwd_bf16(concepts, residuals, intervention_idxs))
    np.testing.assert_allclose(np.asarray(out_bf16), np.asarray(ref), rtol=5e-2, atol=5e-2)

    print("KERNEL_OK")
</pallas_src>

<mosaic_0001>
module attributes {stable_mosaic.version = 11 : i64} {
  func.func @kernel(%arg0: i32, %arg1: memref<8x8xf32, #tpu.memory_space<vmem>>, %arg2: memref<8x8xf32, #tpu.memory_space<vmem>>, %arg3: memref<8x16xf32, #tpu.memory_space<vmem>>, %arg4: memref<32x256xf32, #tpu.memory_space<vmem>>, %arg5: memref<256x128xf32, #tpu.memory_space<vmem>>, %arg6: memref<8x256xf32, #tpu.memory_space<vmem>>, %arg7: memref<8x16xf32, #tpu.memory_space<vmem>>) attributes {dimension_semantics = [#tpu.dimension_semantics<parallel>], iteration_bounds = array<i64: 2>, scalar_prefetch = 0 : i64, scratch_operands = 0 : i64, tpu.core_type = #tpu.core_type<tc>, window_params = [{transform_indices = @transform_0, window_bounds = array<i64: 8, 8>}, {transform_indices = @transform_1, window_bounds = array<i64: 8, 8>}, {transform_indices = @transform_2, window_bounds = array<i64: 8, 16>}, {pipeline_mode = #tpu.pipeline_mode<synchronous>, transform_indices = @transform_3, window_bounds = array<i64: 32, 256>}, {pipeline_mode = #tpu.pipeline_mode<synchronous>, transform_indices = @transform_4, window_bounds = array<i64: 256, 128>}, {pipeline_mode = #tpu.pipeline_mode<synchronous>, transform_indices = @transform_5, window_bounds = array<i64: 8, 256>}, {transform_indices = @transform_6, window_bounds = array<i64: 8, 16>}]} {
    %c0 = arith.constant 0 : index
    %c0_0 = arith.constant 0 : index
    %0 = vector.load %arg6[%c0, %c0_0] : memref<8x256xf32, #tpu.memory_space<vmem>>, vector<1x256xf32>
    %c1 = arith.constant 1 : index
    %c0_1 = arith.constant 0 : index
    %1 = vector.load %arg6[%c1, %c0_1] : memref<8x256xf32, #tpu.memory_space<vmem>>, vector<1x256xf32>
    %c2 = arith.constant 2 : index
    %c0_2 = arith.constant 0 : index
    %2 = vector.load %arg6[%c2, %c0_2] : memref<8x256xf32, #tpu.memory_space<vmem>>, vector<1x256xf32>
    %c3 = arith.constant 3 : index
    %c0_3 = arith.constant 0 : index
    %3 = vector.load %arg6[%c3, %c0_3] : memref<8x256xf32, #tpu.memory_space<vmem>>, vector<1x128xf32>
    %c0_4 = arith.constant 0 : index
    %c0_5 = arith.constant 0 : index
    %4 = vector.load %arg1[%c0_4, %c0_5] : memref<8x8xf32, #tpu.memory_space<vmem>>, vector<8x8xf32>
    %c0_6 = arith.constant 0 : index
    %c0_7 = arith.constant 0 : index
    %5 = vector.load %arg2[%c0_6, %c0_7] : memref<8x8xf32, #tpu.memory_space<vmem>>, vector<8x8xf32>
    %cst = arith.constant 0.000000e+00 : f32
    %6 = vector.broadcast %cst : f32 to vector<8x8xf32>
    %7 = arith.cmpf oeq, %5, %6 : vector<8x8xf32>
    %cst_8 = arith.constant 0.000000e+00 : f32
    %8 = vector.broadcast %cst_8 : f32 to vector<8x8xf32>
    %9 = arith.select %7, %4, %8 : vector<8x8xi1>, vector<8x8xf32>
    %10 = arith.mulf %4, %5 : vector<8x8xf32>
    %c0_9 = arith.constant 0 : index
    %c0_10 = arith.constant 0 : index
    %11 = vector.load %arg3[%c0_9, %c0_10] : memref<8x16xf32, #tpu.memory_space<vmem>>, vector<8x16xf32>
    %c0_11 = arith.constant 0 : index
    %c0_12 = arith.constant 0 : index
    %12 = vector.load %arg4[%c0_11, %c0_12] : memref<32x256xf32, #tpu.memory_space<vmem>>, vector<8x256xf32>
    %cst_13 = arith.constant dense<0.000000e+00> : vector<8x256xf32>
    %13 = tpu.matmul %9, %12, %cst_13 {dimension_numbers = #tpu.dot_dimension_numbers<[1], [0], [0], [1], [0, 0, 1, 1], [], []>} : vector<8x8xf32>, vector<8x256xf32>, vector<8x256xf32> -> vector<8x256xf32>
    %c8 = arith.constant 8 : index
    %c0_14 = arith.constant 0 : index
    %14 = vector.load %arg4[%c8, %c0_14] : memref<32x256xf32, #tpu.memory_space<vmem>>, vector<8x256xf32>
    %cst_15 = arith.constant dense<0.000000e+00> : vector<8x256xf32>
    %15 = tpu.matmul %10, %14, %cst_15 {dimension_numbers = #tpu.dot_dimension_numbers<[1], [0], [0], [1], [0, 0, 1, 1], [], []>} : vector<8x8xf32>, vector<8x256xf32>, vector<8x256xf32> -> vector<8x256xf32>
    %16 = arith.addf %13, %15 : vector<8x256xf32>
    %c16 = arith.constant 16 : index
    %c0_16 = arith.constant 0 : index
    %17 = vector.load %arg4[%c16, %c0_16] : memref<32x256xf32, #tpu.memory_space<vmem>>, vector<16x256xf32>
    %cst_17 = arith.constant dense<0.000000e+00> : vector<8x256xf32>
    %18 = tpu.matmul %11, %17, %cst_17 {dimension_numbers = #tpu.dot_dimension_numbers<[1], [0], [0], [1], [0, 0, 1, 1], [], []>} : vector<8x16xf32>, vector<16x256xf32>, vector<8x256xf32> -> vector<8x256xf32>
    %19 = arith.addf %16, %18 : vector<8x256xf32>
    %20 = vector.broadcast %0 : vector<1x256xf32> to vector<8x256xf32>
    %21 = arith.addf %19, %20 : vector<8x256xf32>
    %22 = tpu.iota {dimensions = array<i32: 1>} : vector<8x256xi32>
    %c128_i32 = arith.constant 128 : i32
    %23 = vector.broadcast %c128_i32 : i32 to vector<8x256xi32>
    %24 = arith.cmpi slt, %22, %23 : vector<8x256xi32>
    %cst_18 = arith.constant 0.000000e+00 : f32
    %25 = vector.broadcast %cst_18 : f32 to vector<8x256xf32>
    %26 = arith.select %24, %21, %25 : vector<8x256xi1>, vector<8x256xf32>
    %27 = arith.subf %21, %26 : vector<8x256xf32>
    %cst_19 = arith.constant dense<0.000000e+00> : vector<8xf32>
    %28 = vector.multi_reduction <add>, %26, %cst_19 [1] : vector<8x256xf32> to vector<8xf32>
    %29 = vector.shape_cast %28 : vector<8xf32> to vector<8x1xf32>
    %cst_20 = arith.constant dense<0.000000e+00> : vector<8xf32>
    %30 = vector.multi_reduction <add>, %27, %cst_20 [1] : vector<8x256xf32> to vector<8xf32>
    %31 = vector.shape_cast %30 : vector<8xf32> to vector<8x1xf32>
    %32 = arith.mulf %26, %26 : vector<8x256xf32>
    %cst_21 = arith.constant dense<0.000000e+00> : vector<8xf32>
    %33 = vector.multi_reduction <add>, %32, %cst_21 [1] : vector<8x256xf32> to vector<8xf32>
    %34 = vector.shape_cast %33 : vector<8xf32> to vector<8x1xf32>
    %35 = arith.mulf %27, %27 : vector<8x256xf32>
    %cst_22 = arith.constant dense<0.000000e+00> : vector<8xf32>
    %36 = vector.multi_reduction <add>, %35, %cst_22 [1] : vector<8x256xf32> to vector<8xf32>
    %37 = vector.shape_cast %36 : vector<8xf32> to vector<8x1xf32>
    %cst_23 = arith.constant 3.125000e-02 : f32
    %38 = vector.broadcast %cst_23 : f32 to vector<8x1xf32>
    %39 = arith.mulf %29, %38 : vector<8x1xf32>
    %cst_24 = arith.constant 3.125000e-02 : f32
    %40 = vector.broadcast %cst_24 : f32 to vector<8x1xf32>
    %41 = arith.mulf %31, %40 : vector<8x1xf32>
    %cst_25 = arith.constant 3.125000e-02 : f32
    %42 = vector.broadcast %cst_25 : f32 to vector<8x1xf32>
    %43 = arith.mulf %34, %42 : vector<8x1xf32>
    %44 = arith.mulf %39, %39 : vector<8x1xf32>
    %45 = arith.subf %43, %44 : vector<8x1xf32>
    %cst_26 = arith.constant 9.99999974E-6 : f32
    %46 = vector.broadcast %cst_26 : f32 to vector<8x1xf32>
    %47 = arith.addf %45, %46 : vector<8x1xf32>
    %48 = math.rsqrt %47 : vector<8x1xf32>
    %cst_27 = arith.constant 3.125000e-02 : f32
    %49 = vector.broadcast %cst_27 : f32 to vector<8x1xf32>
    %50 = arith.mulf %37, %49 : vector<8x1xf32>
    %51 = arith.mulf %41, %41 : vector<8x1xf32>
    %52 = arith.subf %50, %51 : vector<8x1xf32>
    %cst_28 = arith.constant 9.99999974E-6 : f32
    %53 = vector.broadcast %cst_28 : f32 to vector<8x1xf32>
    %54 = arith.addf %52, %53 : vector<8x1xf32>
    %55 = math.rsqrt %54 : vector<8x1xf32>
    %56 = vector.shape_cast %39 : vector<8x1xf32> to vector<8x1xf32>
    %57 = vector.broadcast %56 : vector<8x1xf32> to vector<8x256xf32>
    %58 = vector.shape_cast %41 : vector<8x1xf32> to vector<8x1xf32>
    %59 = vector.broadcast %58 : vector<8x1xf32> to vector<8x256xf32>
    %60 = arith.select %24, %57, %59 : vector<8x256xi1>, vector<8x256xf32>
    %61 = vector.shape_cast %48 : vector<8x1xf32> to vector<8x1xf32>
    %62 = vector.broadcast %61 : vector<8x1xf32> to vector<8x256xf32>
    %63 = vector.shape_cast %55 : vector<8x1xf32> to vector<8x1xf32>
    %64 = vector.broadcast %63 : vector<8x1xf32> to vector<8x256xf32>
    %65 = arith.select %24, %62, %64 : vector<8x256xi1>, vector<8x256xf32>
    %66 = arith.subf %21, %60 : vector<8x256xf32>
    %67 = arith.mulf %66, %65 : vector<8x256xf32>
    %68 = vector.broadcast %1 : vector<1x256xf32> to vector<8x256xf32>
    %69 = arith.mulf %67, %68 : vector<8x256xf32>
    %70 = vector.broadcast %2 : vector<1x256xf32> to vector<8x256xf32>
    %71 = arith.addf %69, %70 : vector<8x256xf32>
    %c0_29 = arith.constant 0 : index
    %c0_30 = arith.constant 0 : index
    %72 = vector.load %arg5[%c0_29, %c0_30] : memref<256x128xf32, #tpu.memory_space<vmem>>, vector<256x128xf32>
    %cst_31 = arith.constant dense<0.000000e+00> : vector<8x128xf32>
    %73 = tpu.matmul %71, %72, %cst_31 {dimension_numbers = #tpu.dot_dimension_numbers<[1], [0], [0], [1], [0, 0, 1, 1], [], []>} : vector<8x256xf32>, vector<256x128xf32>, vector<8x128xf32> -> vector<8x128xf32>
    %74 = vector.broadcast %3 : vector<1x128xf32> to vector<8x128xf32>
    %75 = arith.addf %73, %74 : vector<8x128xf32>
    %76 = vector.extract_strided_slice %75 {offsets = [0, 0], sizes = [8, 16], strides = [1, 1]} : vector<8x128xf32> to vector<8x16xf32>
    %c0_32 = arith.constant 0 : index
    %c0_33 = arith.constant 0 : index
    %77 = vector.load %arg7[%c0_32, %c0_33] : memref<8x16xf32, #tpu.memory_space<vmem>>, vector<8x16xf32>
    tpu.vector_store %arg7[%c0_32, %c0_33], %76 {strides = array<i32>} : memref<8x16xf32, #tpu.memory_space<vmem>>, vector<8x16xf32>,
    return
  }
  func.func @transform_0(%arg0: i32) -> (i32, i32) {
    %c0_i32 = arith.constant 0 : i32
    %c0_i32_0 = arith.constant 0 : i32
    return %arg0, %c0_i32 : i32, i32
  }
  func.func @transform_1(%arg0: i32) -> (i32, i32) {
    %c0_i32 = arith.constant 0 : i32
    %c0_i32_0 = arith.constant 0 : i32
    return %arg0, %c0_i32 : i32, i32
  }
  func.func @transform_2(%arg0: i32) -> (i32, i32) {
    %c0_i32 = arith.constant 0 : i32
    %c0_i32_0 = arith.constant 0 : i32
    return %arg0, %c0_i32 : i32, i32
  }
  func.func @transform_3(%arg0: i32) -> (i32, i32) {
    %c0_i32 = arith.constant 0 : i32
    %c0_i32_0 = arith.constant 0 : i32
    %c0_i32_1 = arith.constant 0 : i32
    return %c0_i32, %c0_i32_0 : i32, i32
  }
  func.func @transform_4(%arg0: i32) -> (i32, i32) {
    %c0_i32 = arith.constant 0 : i32
    %c0_i32_0 = arith.constant 0 : i32
    %c0_i32_1 = arith.constant 0 : i32
    return %c0_i32, %c0_i32_0 : i32, i32
  }
  func.func @transform_5(%arg0: i32) -> (i32, i32) {
    %c0_i32 = arith.constant 0 : i32
    %c0_i32_0 = arith.constant 0 : i32
    %c0_i32_1 = arith.constant 0 : i32
    return %c0_i32, %c0_i32_0 : i32, i32
  }
  func.func @transform_6(%arg0: i32) -> (i32, i32) {
    %c0_i32 = arith.constant 0 : i32
    %c0_i32_0 = arith.constant 0 : i32
    return %arg0, %c0_i32 : i32, i32
  }
}

</mosaic_0001>

<llo_original>
// kernel: cross_attention_forward.1
$region0: #{cross_attention_forward.1}
  #allocation0 [shape = 'u32[]', space=smem, size = 0x4, offset = 0x4, fixed_abs, tag = 'smem constant byte address 0x4 - core index']
  #allocation1 [shape = 'u32[144,128]{1,0:T(1,128)}', space=vmem, size = 0x12000, scoped, tag = 'internal scratch']
  %s0 = inlined_call_operand.vmem [shape: f32[16,8], index: 0, kind: input, shape index: {}]
  %s1 = inlined_call_operand.vmem [shape: f32[16,8], index: 1, kind: input, shape index: {}]
  %s2 = inlined_call_operand.vmem [shape: f32[16,16], index: 2, kind: input, shape index: {}]
  %s3 = inlined_call_operand.hbm [shape: f32[32,256], index: 3, kind: input, shape index: {}]
  %s4 = inlined_call_operand.hbm [shape: f32[256,128], index: 4, kind: input, shape index: {}]
  %s5 = inlined_call_operand.vmem [shape: f32[8,256], index: 5, kind: input, shape index: {}]
  %s6 = inlined_call_operand.hbm [shape: f32[16,16], index: 6, kind: output, shape index: {}]
  %s7 = sld [smem:[#allocation0]]
  $region65: #{cross_attention_forward.1} parent=0
    _
  %s9 = ssub.s32 1, %s7
  %s10 = scalar_select 0, %s9, %s7
  $region1: #{cross_attention_forward.1} parent=0
    #allocation2 [shape = 'u8[32768]{0}', space=vmem, size = 0x8000, scoped, tag = 'input window, operand 3, single buffered']
    #allocation3 [shape = 's32[2]{0}', space=sflag, size = 0x8, scoped, tag = 'scoped memory for cross_attention_forward.1']
    #allocation4 [shape = 's32[2]{0}', space=sflag, size = 0x8, scoped, tag = 'scoped memory for cross_attention_forward.1']
    #allocation5 [shape = 'u8[131072]{0}', space=vmem, size = 0x20000, scoped, tag = 'input window, operand 4, single buffered']
    #allocation6 [shape = 's32[1]{0}', space=sflag, size = 0x4, scoped, tag = 'scoped memory for cross_attention_forward.1']
    #allocation7 [shape = 'u8[8192]{0}', space=vmem, size = 0x2000, scoped, tag = 'output window, operand 0']
    %11 = vsyncpa [#allocation3], 0
    %12 = vsyncpa [#allocation6], 0
    %13 = vsyncpa [#allocation4], 0
    %s14 = scalar_lea.sflag [#allocation4], 1
    %15 = vsyncpa %s14, 0
    loop: start=0, step=1, limit=4
    $region2: #{cross_attention_forward.1} parent=1 // loop_pre_header
      _
    $region3: #{cross_attention_forward.1} parent=1 // loop_header
      %s17 = sphi 0, %s21
      %p18 = scmp.ge.s32.totalorder %s17, 4
      %s27 = sphi 0, %s29
      %s30 = sphi 0, %s27
      %s31 = sphi 0, %s30
      %s47 = sphi 0, %s31
      %s53 = sphi 0, %s55
      %s56 = sphi 0, %s53
      %s57 = sphi 0, %s56
      %s73 = sphi 0, %s57
      %s79 = sphi 0, %s81
      %s82 = sphi 0, %s79
      %s83 = sphi 0, %s82
      %s99 = sphi 0, %s83
      %s103 = sphi 0, %s103
      %s105 = sphi 0, %s103
      %s106 = sphi 0, %s105
      %s120 = sphi 0, %s106
      %s124 = sphi 0, %s124
      %s126 = sphi 0, %s124
      %s127 = sphi 0, %s126
      %s141 = sphi 0, %s127
      %s145 = sphi 0, %s145
      %s147 = sphi 0, %s145
      %s148 = sphi 0, %s147
      %s162 = sphi 0, %s148
      %s168 = sphi 0, %s170
      %s171 = sphi 0, %s168
      %s172 = sphi 0, %s171
      %s188 = sphi 0, %s172
    $region4: #{cross_attention_forward.1} parent=1 // loop_header_branch
      %20 = sbr.rel (%p18) target = $region8
    $region5: #{cross_attention_forward.1} parent=1 // loop_body
      %s22 = ssub.s32 %s17, 1
      %s23 = ssub.s32 %s17, 2
      %s24 = sadd.s32 %s17, 1
      %s25 = ssub.s32 %s17, %s24
      %p26 = scmp.eq.s32.totalorder %s25, 0
      %s28 = sadd.s32 %s27, 1
      %s29 = scalar_select %p26, %s27, %s28
      %p32 = pneg %p26
      %p33 = scmp.eq.s32.totalorder %s17, 1
      %p34 = por %p32, %p33
      %p35 = scmp.ne.s32.totalorder %s27, %s30
      %p36 = scmp.eq.s32.totalorder %s17, 0
      %p37 = por %p35, %p36
      %p38 = scmp.ne.s32.totalorder %s27, %s30
      %p39 = scmp.eq.s32.totalorder %s22, 1
      %p40 = por %p38, %p39
      %p41 = scmp.ne.s32.totalorder %s30, %s31
      %p42 = scmp.eq.s32.totalorder %s22, 0
      %p43 = por %p41, %p42
      %p44 = scmp.ne.s32.totalorder %s30, %s31
      %p45 = scmp.eq.s32.totalorder %s23, 1
      %p46 = por %p44, %p45
      %p48 = scmp.ne.s32.totalorder %s31, %s47
      %p49 = scmp.eq.s32.totalorder %s23, 0
      %p50 = por %p48, %p49
      %s51 = ssub.s32 %s17, %s24
      %p52 = scmp.eq.s32.totalorder %s51, 0
      %s54 = sadd.s32 %s53, 1
      %s55 = scalar_select %p52, %s53, %s54
      %p58 = pneg %p52
      %p59 = scmp.eq.s32.totalorder %s17, 1
      %p60 = por %p58, %p59
      %p61 = scmp.ne.s32.totalorder %s53, %s56
      %p62 = scmp.eq.s32.totalorder %s17, 0
      %p63 = por %p61, %p62
      %p64 = scmp.ne.s32.totalorder %s53, %s56
      %p65 = scmp.eq.s32.totalorder %s22, 1
      %p66 = por %p64, %p65
      %p67 = scmp.ne.s32.totalorder %s56, %s57
      %p68 = scmp.eq.s32.totalorder %s22, 0
      %p69 = por %p67, %p68
      %p70 = scmp.ne.s32.totalorder %s56, %s57
      %p71 = scmp.eq.s32.totalorder %s23, 1
      %p72 = por %p70, %p71
      %p74 = scmp.ne.s32.totalorder %s57, %s73
      %p75 = scmp.eq.s32.totalorder %s23, 0
      %p76 = por %p74, %p75
      %s77 = ssub.s32 %s17, %s24
      %p78 = scmp.eq.s32.totalorder %s77, 0
      %s80 = sadd.s32 %s79, 1
      %s81 = scalar_select %p78, %s79, %s80
      %p84 = pneg %p78
      %p85 = scmp.eq.s32.totalorder %s17, 1
      %p86 = por %p84, %p85
      %p87 = scmp.ne.s32.totalorder %s79, %s82
      %p88 = scmp.eq.s32.totalorder %s17, 0
      %p89 = por %p87, %p88
      %p90 = scmp.ne.s32.totalorder %s79, %s82
      %p91 = scmp.eq.s32.totalorder %s22, 1
      %p92 = por %p90, %p91
      %p93 = scmp.ne.s32.totalorder %s82, %s83
      %p94 = scmp.eq.s32.totalorder %s22, 0
      %p95 = por %p93, %p94
      %p96 = scmp.ne.s32.totalorder %s82, %s83
      %p97 = scmp.eq.s32.totalorder %s23, 1
      %p98 = por %p96, %p97
      %p100 = scmp.ne.s32.totalorder %s83, %s99
      %p101 = scmp.eq.s32.totalorder %s23, 0
      %p102 = por %p100, %p101
      %s104 = sadd.s32 %s103, 1
      %p107 = scmp.eq.s32.totalorder %s17, 1
      %p108 = scmp.ne.s32.totalorder %s103, %s105
      %p109 = scmp.eq.s32.totalorder %s17, 0
      %p110 = por %p108, %p109
      %p111 = scmp.ne.s32.totalorder %s103, %s105
      %p112 = scmp.eq.s32.totalorder %s22, 1
      %p113 = por %p111, %p112
      %p114 = scmp.ne.s32.totalorder %s105, %s106
      %p115 = scmp.eq.s32.totalorder %s22, 0
      %p116 = por %p114, %p115
      %p117 = scmp.ne.s32.totalorder %s105, %s106
      %p118 = scmp.eq.s32.totalorder %s23, 1
      %p119 = por %p117, %p118
      %p121 = scmp.ne.s32.totalorder %s106, %s120
      %p122 = scmp.eq.s32.totalorder %s23, 0
      %p123 = por %p121, %p122
      %s125 = sadd.s32 %s124, 1
      %p128 = scmp.eq.s32.totalorder %s17, 1
      %p129 = scmp.ne.s32.totalorder %s124, %s126
      %p130 = scmp.eq.s32.totalorder %s17, 0
      %p131 = por %p129, %p130
      %p132 = scmp.ne.s32.totalorder %s124, %s126
      %p133 = scmp.eq.s32.totalorder %s22, 1
      %p134 = por %p132, %p133
      %p135 = scmp.ne.s32.totalorder %s126, %s127
      %p136 = scmp.eq.s32.totalorder %s22, 0
      %p137 = por %p135, %p136
      %p138 = scmp.ne.s32.totalorder %s126, %s127
      %p139 = scmp.eq.s32.totalorder %s23, 1
      %p140 = por %p138, %p139
      %p142 = scmp.ne.s32.totalorder %s127, %s141
      %p143 = scmp.eq.s32.totalorder %s23, 0
      %p144 = por %p142, %p143
      %s146 = sadd.s32 %s145, 1
      %p149 = scmp.eq.s32.totalorder %s17, 1
      %p150 = scmp.ne.s32.totalorder %s145, %s147
      %p151 = scmp.eq.s32.totalorder %s17, 0
      %p152 = por %p150, %p151
      %p153 = scmp.ne.s32.totalorder %s145, %s147
      %p154 = scmp.eq.s32.totalorder %s22, 1
      %p155 = por %p153, %p154
      %p156 = scmp.ne.s32.totalorder %s147, %s148
      %p157 = scmp.eq.s32.totalorder %s22, 0
      %p158 = por %p156, %p157
      %p159 = scmp.ne.s32.totalorder %s147, %s148
      %p160 = scmp.eq.s32.totalorder %s23, 1
      %p161 = por %p159, %p160
      %p163 = scmp.ne.s32.totalorder %s148, %s162
      %p164 = scmp.eq.s32.totalorder %s23, 0
      %p165 = por %p163, %p164
      %s166 = ssub.s32 %s17, %s24
      %p167 = scmp.eq.s32.totalorder %s166, 0
      %s169 = sadd.s32 %s168, 1
      %s170 = scalar_select %p167, %s168, %s169
      %p173 = pneg %p167
      %p174 = scmp.eq.s32.totalorder %s17, 1
      %p175 = por %p173, %p174
      %p176 = scmp.ne.s32.totalorder %s168, %s171
      %p177 = scmp.eq.s32.totalorder %s17, 0
      %p178 = por %p176, %p177
      %p179 = scmp.ne.s32.totalorder %s168, %s171
      %p180 = scmp.eq.s32.totalorder %s22, 1
      %p181 = por %p179, %p180
      %p182 = scmp.ne.s32.totalorder %s171, %s172
      %p183 = scmp.eq.s32.totalorder %s22, 0
      %p184 = por %p182, %p183
      %p185 = scmp.ne.s32.totalorder %s171, %s172
      %p186 = scmp.eq.s32.totalorder %s23, 1
      %p187 = por %p185, %p186
      %p189 = scmp.ne.s32.totalorder %s172, %s188
      %p190 = scmp.eq.s32.totalorder %s23, 0
      %p191 = por %p189, %p190
      %p192 = scmp.le.s32.totalorder 1, %s17
      %p193 = scmp.lt.s32.totalorder %s17, 3
      %p194 = pnand %p192, %p193
      %p195 = pneg %p194
      // Predicated region
      $region9: #{cross_attention_forward.1} parent=5 // pred_check
        _
      $region10: #{cross_attention_forward.1} parent=5 // pred_check_branch
        %197 = sbr.rel (%p194) target = $region12
      $region11: #{cross_attention_forward.1} parent=5 // pred_region
        %s198 = ssub.s32 %s17, 1
        // Predicated region
        $region13: #{cross_attention_forward.1} parent=11 // pred_check
          %p199 = pneg %p116
        $region14: #{cross_attention_forward.1} parent=11 // pred_check_branch
          %201 = sbr.rel (%p199) target = $region16
        $region15: #{cross_attention_forward.1} parent=11 // pred_region
          %s203 = ssub.s32 1024, 1024
          %204 = vsyncadd [#allocation3], %s203
          %s205 = sshll.u32 [#allocation2], 4
          %s206 = int_to_ptr.vmem [resolvable:$true] %s205
          %211 = dma.hbm_to_vmem [thread:$0]  %s3, 1024, %s206, [#allocation3], 256, 256, 16
        $region16: #{cross_attention_forward.1} parent=11 // pred_fallthru
          _
        // Predicated region
        $region17: #{cross_attention_forward.1} parent=11 // pred_check
          %p212 = pneg %p137
        $region18: #{cross_attention_forward.1} parent=11 // pred_check_branch
          %214 = sbr.rel (%p212) target = $region20
        $region19: #{cross_attention_forward.1} parent=11 // pred_region
          %s216 = ssub.s32 4096, 4096
          %217 = vsyncadd [#allocation6], %s216
          %s218 = sshll.u32 [#allocation5], 4
          %s219 = int_to_ptr.vmem [resolvable:$true] %s218
          %224 = dma.hbm_to_vmem [thread:$0]  %s4, 4096, %s219, [#allocation6], 128, 128, 8
        $region20: #{cross_attention_forward.1} parent=11 // pred_fallthru
          _
        // Predicated region
        $region21: #{cross_attention_forward.1} parent=11 // pred_check
          %p225 = pneg %p158
        $region22: #{cross_attention_forward.1} parent=11 // pred_check_branch
          %227 = sbr.rel (%p225) target = $region24
        $region23: #{cross_attention_forward.1} parent=11 // pred_region
          _
        $region24: #{cross_attention_forward.1} parent=11 // pred_fallthru
          _
      $region12: #{cross_attention_forward.1} parent=5 // pred_fallthru
        _
      %p228 = scmp.lt.s32.totalorder %s17, 2
      // Predicated region
      $region25: #{cross_attention_forward.1} parent=5 // pred_check
        %p229 = pneg %p228
      $region26: #{cross_attention_forward.1} parent=5 // pred_check_branch
        %231 = sbr.rel (%p229) target = $region28
      $region27: #{cross_attention_forward.1} parent=5 // pred_region
        // Predicated region
        $region29: #{cross_attention_forward.1} parent=27 // pred_check
          %p232 = pneg %p37
        $region30: #{cross_attention_forward.1} parent=27 // pred_check_branch
          %234 = sbr.rel (%p232) target = $region32
        $region31: #{cross_attention_forward.1} parent=27 // pred_region
          %p235 = scmp.lt.s32.totalorder %s17, 1
          %s236 = scalar_select %p235, %s17, 1
          %s237 = smul.addr %s236, 8
          %s238 = scalar_lea.vmem %s0, %s237
        $region32: #{cross_attention_forward.1} parent=27 // pred_fallthru
          _
        // Predicated region
        $region33: #{cross_attention_forward.1} parent=27 // pred_check
          %p239 = pneg %p63
        $region34: #{cross_attention_forward.1} parent=27 // pred_check_branch
          %241 = sbr.rel (%p239) target = $region36
        $region35: #{cross_attention_forward.1} parent=27 // pred_region
          %p242 = scmp.lt.s32.totalorder %s17, 1
          %s243 = scalar_select %p242, %s17, 1
          %s244 = smul.addr %s243, 8
          %s245 = scalar_lea.vmem %s1, %s244
        $region36: #{cross_attention_forward.1} parent=27 // pred_fallthru
          _
        // Predicated region
        $region37: #{cross_attention_forward.1} parent=27 // pred_check
          %p246 = pneg %p89
        $region38: #{cross_attention_forward.1} parent=27 // pred_check_branch
          %248 = sbr.rel (%p246) target = $region40
        $region39: #{cross_attention_forward.1} parent=27 // pred_region
          %p249 = scmp.lt.s32.totalorder %s17, 1
          %s250 = scalar_select %p249, %s17, 1
          %s251 = smul.addr %s250, 8
          %s252 = scalar_lea.vmem %s2, %s251
        $region40: #{cross_attention_forward.1} parent=27 // pred_fallthru
          _
      $region28: #{cross_attention_forward.1} parent=5 // pred_fallthru
        _
      %p253 = scmp.le.s32.totalorder 1, %s17
      %p254 = scmp.lt.s32.totalorder %s17, 3
      %p255 = pnand %p253, %p254
      %p256 = pneg %p255
      // Predicated region
      $region41: #{cross_attention_forward.1} parent=5 // pred_check
        _
      $region42: #{cross_attention_forward.1} parent=5 // pred_check_branch
        %258 = sbr.rel (%p255) target = $region44
      $region43: #{cross_attention_forward.1} parent=5 // pred_region
        %s259 = ssub.s32 %s17, 1
        // Predicated region
        $region45: #{cross_attention_forward.1} parent=43 // pred_check
          %p260 = pneg %p116
        $region46: #{cross_attention_forward.1} parent=43 // pred_check_branch
          %262 = sbr.rel (%p260) target = $region48
        $region47: #{cross_attention_forward.1} parent=43 // pred_region
          %263 = dma.done [#allocation3], 1024
        $region48: #{cross_attention_forward.1} parent=43 // pred_fallthru
          _
        // Predicated region
        $region49: #{cross_attention_forward.1} parent=43 // pred_check
          %p264 = pneg %p137
        $region50: #{cross_attention_forward.1} parent=43 // pred_check_branch
          %266 = sbr.rel (%p264) target = $region52
        $region51: #{cross_attention_forward.1} parent=43 // pred_region
          %267 = dma.done [#allocation6], 4096
        $region52: #{cross_attention_forward.1} parent=43 // pred_fallthru
          _
        %p268 = scmp.lt.s32.totalorder %s22, 1
        %s269 = scalar_select %p268, %s22, 1
        %s270 = smul.addr %s269, 8
        %s271 = scalar_lea.vmem %s0, %s270
        %p272 = pneg %p43
        %p273 = pneg %p40
        %p274 = scmp.lt.s32.totalorder %s22, 1
        %s275 = scalar_select %p274, %s22, 1
        %s276 = smul.addr %s275, 8
        %s277 = scalar_lea.vmem %s1, %s276
        %p278 = pneg %p69
        %p279 = pneg %p66
        %p280 = scmp.lt.s32.totalorder %s22, 1
        %s281 = scalar_select %p280, %s22, 1
        %s282 = smul.addr %s281, 8
        %s283 = scalar_lea.vmem %s2, %s282
        %p284 = pneg %p95
        %p285 = pneg %p92
        %p286 = pneg %p116
        %p287 = pneg %p113
        %p288 = pneg %p137
        %p289 = pneg %p134
        %p290 = pneg %p158
        %p291 = pneg %p155
        %p292 = pneg %p184
        %p293 = pneg %p181
        %s294 = sand.u32 %s171, 1
        %s295 = scalar_lea.sflag [#allocation4], %s294
        %s296 = sand.u32 %s171, 1
        %s297 = smul.addr %s296, 8
        %s298 = scalar_lea.vmem [#allocation7], %s297
        %p299 = scmp.lt.s32.totalorder %s22, 1
        %s300 = scalar_select %p299, %s22, 1
        %s301 = smul.addr %s300, 8
        %s302 = scalar_lea.vmem %s0, %s301
        %p303 = scmp.lt.s32.totalorder %s22, 1
        %s304 = scalar_select %p303, %s22, 1
        %s305 = smul.addr %s304, 8
        %s306 = scalar_lea.vmem %s1, %s305
        %p307 = scmp.lt.s32.totalorder %s22, 1
        %s308 = scalar_select %p307, %s22, 1
        %s309 = smul.addr %s308, 8
        %s310 = scalar_lea.vmem %s2, %s309
        %v311 = vld [vmem:[%s5] ss:$8 sm:$0x3]
        %s312 = scalar_lea.vmem %s5, 1
        %v313 = vld [vmem:[%s312] ss:$8 sm:$0x3]
        %s314 = scalar_lea.vmem %s5, 2
        %v315 = vld [vmem:[%s314] ss:$8 sm:$0x3]
        %v316 = vld [vmem:[%s5 + $0x3] ss:$0 sm:$0xff]
        %v317 = vld [vmem:[%s302] sm:$0xff]
        %v318 = vld [vmem:[%s306] sm:$0xff]
        %vm319 = vcmp.eq.f32.partialorder %v318, 0.0
        %v320 = vsel %vm319, %v317, 0.0
        %v321 = vmul.f32 %v317, %v318
        %v322 = vld [vmem:[%s310] sm:$0xff]
        %v323 = vld [vmem:[#allocation2] sm:$0xff]
        %v324 = vld [vmem:[#allocation2 + $0x8] sm:$0xff]
        %v325 = vld [vmem:[#allocation2 + $0x10] sm:$0xff]
        %v326 = vld [vmem:[#allocation2 + $0x18] sm:$0xff]
        %vm327 = vcmask 64512
        %v329 = vsel %vm327, %v321, 0
        %331 = vmatprep.subr.mxu0 0.0
        %332 = vmatpush1.msra.mxu0 0.0
        %333 = vmatprep.subr.mxu0 0.0
        %334 = vmatpush1.msra.mxu0 0.0
        %335 = vmatprep.subr.mxu0 0.0
        %336 = vmatpush1.msra.mxu0 0.0
        %337 = vmatprep.subr.mxu0 0.0
        %338 = vmatpush1.msra.mxu0 0.0
        %339 = vmatprep.subr.mxu0 0.0
        %340 = vmatpush1.msra.mxu0 0.0
        %341 = vmatprep.subr.mxu0 0.0
        %342 = vmatpush1.msra.mxu0 0.0
        %343 = vmatprep.subr.mxu0 0.0
        %344 = vmatpush1.msra.mxu0 0.0
        %345 = vmatprep.subr.mxu0 0.0
        %346 = vmatpush1.msra.mxu0 0.0
        %347 = vmatprep.subr.mxu0 0.0
        %348 = vmatpush1.msra.mxu0 0.0
        %349 = vmatprep.subr.mxu0 0.0
        %350 = vmatpush1.msra.mxu0 0.0
        %351 = vmatprep.subr.mxu0 0.0
        %352 = vmatpush1.msra.mxu0 0.0
        %353 = vmatprep.subr.mxu0 0.0
        %354 = vmatpush1.msra.mxu0 0.0
        %355 = vmatprep.subr.mxu0 0.0
        %356 = vmatpush1.msra.mxu0 0.0
        %357 = vmatprep.subr.mxu0 0.0
        %358 = vmatpush1.msra.mxu0 0.0
        %359 = vmatprep.subr.mxu0 0.0
        %360 = vmatpush1.msra.mxu0 0.0
        %361 = vmatprep.subr.mxu0 %v326
        %362 = vmatpush1.msra.mxu0 %v325
        %363 = vmatprep.subr.mxu0 0.0
        %364 = vmatpush2.msra.mxu0 0.0
        %365 = vmatprep.subr.mxu0 0.0
        %366 = vmatpush2.msra.mxu0 0.0
        %367 = vmatprep.subr.mxu0 0.0
        %368 = vmatpush2.msra.mxu0 0.0
        %369 = vmatprep.subr.mxu0 0.0
        %370 = vmatpush2.msra.mxu0 0.0
        %371 = vmatprep.subr.mxu0 0.0
        %372 = vmatpush2.msra.mxu0 0.0
        %373 = vmatprep.subr.mxu0 0.0
        %374 = vmatpush2.msra.mxu0 0.0
        %375 = vmatprep.subr.mxu0 0.0
        %376 = vmatpush2.msra.mxu0 0.0
        %377 = vmatprep.subr.mxu0 0.0
        %378 = vmatpush2.msra.mxu0 0.0
        %379 = vmatprep.subr.mxu0 0.0
        %380 = vmatpush2.msra.mxu0 0.0
        %381 = vmatprep.subr.mxu0 0.0
        %382 = vmatpush2.msra.mxu0 0.0
        %383 = vmatprep.subr.mxu0 0.0
        %384 = vmatpush2.msra.mxu0 0.0
        %385 = vmatprep.subr.mxu0 0.0
        %386 = vmatpush2.msra.mxu0 0.0
        %387 = vmatprep.subr.mxu0 0.0
        %388 = vmatpush2.msra.mxu0 0.0
        %389 = vmatprep.subr.mxu0 0.0
        %390 = vmatpush2.msra.mxu0 0.0
        %391 = vmatprep.subr.mxu0 0.0
        %392 = vmatpush2.msra.mxu0 0.0
        %393 = vmatprep.subr.mxu0 0.0
        %394 = vmatpush2.msra.mxu0 0.0
        %395 = vmatprep.mubr.f32.mxu0 0.0
        %396 = vmatmul.mubr.f32.gmra.mxu0 %v329
        %v397 = vpop.f32.mrf.mxu0
        %v398 = vadd.f32 0.0, %v397
        %v399 = vpop.f32.mrf.mxu0
        %v400 = vadd.f32 0.0, %v399
        %401 = vdwg.mxu0
        %v403 = vsel %vm327, %v320, 0
        %405 = vmatprep.subr.mxu0 0.0
        %406 = vmatpush1.msra.mxu0 0.0
        %407 = vmatprep.subr.mxu0 0.0
        %408 = vmatpush1.msra.mxu0 0.0
        %409 = vmatprep.subr.mxu0 0.0
        %410 = vmatpush1.msra.mxu0 0.0
        %411 = vmatprep.subr.mxu0 0.0
        %412 = vmatpush1.msra.mxu0 0.0
        %413 = vmatprep.subr.mxu0 0.0
        %414 = vmatpush1.msra.mxu0 0.0
        %415 = vmatprep.subr.mxu0 0.0
        %416 = vmatpush1.msra.mxu0 0.0
        %417 = vmatprep.subr.mxu0 0.0
        %418 = vmatpush1.msra.mxu0 0.0
        %419 = vmatprep.subr.mxu0 0.0
        %420 = vmatpush1.msra.mxu0 0.0
        %421 = vmatprep.subr.mxu0 0.0
        %422 = vmatpush1.msra.mxu0 0.0
        %423 = vmatprep.subr.mxu0 0.0
        %424 = vmatpush1.msra.mxu0 0.0
        %425 = vmatprep.subr.mxu0 0.0
        %426 = vmatpush1.msra.mxu0 0.0
        %427 = vmatprep.subr.mxu0 0.0
        %428 = vmatpush1.msra.mxu0 0.0
        %429 = vmatprep.subr.mxu0 0.0
        %430 = vmatpush1.msra.mxu0 0.0
        %431 = vmatprep.subr.mxu0 0.0
        %432 = vmatpush1.msra.mxu0 0.0
        %433 = vmatprep.subr.mxu0 0.0
        %434 = vmatpush1.msra.mxu0 0.0
        %435 = vmatprep.subr.mxu0 %v324
        %436 = vmatpush1.msra.mxu0 %v323
        %437 = vmatprep.subr.mxu0 0.0
        %438 = vmatpush2.msra.mxu0 0.0
        %439 = vmatprep.subr.mxu0 0.0
        %440 = vmatpush2.msra.mxu0 0.0
        %441 = vmatprep.subr.mxu0 0.0
        %442 = vmatpush2.msra.mxu0 0.0
        %443 = vmatprep.subr.mxu0 0.0
        %444 = vmatpush2.msra.mxu0 0.0
        %445 = vmatprep.subr.mxu0 0.0
        %446 = vmatpush2.msra.mxu0 0.0
        %447 = vmatprep.subr.mxu0 0.0
        %448 = vmatpush2.msra.mxu0 0.0
        %449 = vmatprep.subr.mxu0 0.0
        %450 = vmatpush2.msra.mxu0 0.0
        %451 = vmatprep.subr.mxu0 0.0
        %452 = vmatpush2.msra.mxu0 0.0
        %453 = vmatprep.subr.mxu0 0.0
        %454 = vmatpush2.msra.mxu0 0.0
        %455 = vmatprep.subr.mxu0 0.0
        %456 = vmatpush2.msra.mxu0 0.0
        %457 = vmatprep.subr.mxu0 0.0
        %458 = vmatpush2.msra.mxu0 0.0
        %459 = vmatprep.subr.mxu0 0.0
        %460 = vmatpush2.msra.mxu0 0.0
        %461 = vmatprep.subr.mxu0 0.0
        %462 = vmatpush2.msra.mxu0 0.0
        %463 = vmatprep.subr.mxu0 0.0
        %464 = vmatpush2.msra.mxu0 0.0
        %465 = vmatprep.subr.mxu0 0.0
        %466 = vmatpush2.msra.mxu0 0.0
        %467 = vmatprep.subr.mxu0 0.0
        %468 = vmatpush2.msra.mxu0 0.0
        %469 = vmatprep.mubr.f32.mxu0 0.0
        %470 = vmatmul.mubr.f32.gmra.mxu0 %v403
        %v471 = vpop.f32.mrf.mxu0
        %v472 = vadd.f32 %v398, %v471
        %v473 = vpop.f32.mrf.mxu0
        %v474 = vadd.f32 %v400, %v473
        %475 = vdwg.mxu0
        %v476 = vld [vmem:[#allocation2 + $0x20] sm:$0xff]
        %v477 = vld [vmem:[#allocation2 + $0x28] sm:$0xff]
        %v478 = vld [vmem:[#allocation2 + $0x30] sm:$0xff]
        %v479 = vld [vmem:[#allocation2 + $0x38] sm:$0xff]
        %vm480 = vcmask 130048
        %v482 = vsel %vm480, %v322, 0
        %484 = vmatprep.subr.mxu0 0.0
        %485 = vmatpush1.msra.mxu0 0.0
        %486 = vmatprep.subr.mxu0 0.0
        %487 = vmatpush1.msra.mxu0 0.0
        %488 = vmatprep.subr.mxu0 0.0
        %489 = vmatpush1.msra.mxu0 0.0
        %490 = vmatprep.subr.mxu0 0.0
        %491 = vmatpush1.msra.mxu0 0.0
        %492 = vmatprep.subr.mxu0 0.0
        %493 = vmatpush1.msra.mxu0 0.0
        %494 = vmatprep.subr.mxu0 0.0
        %495 = vmatpush1.msra.mxu0 0.0
        %496 = vmatprep.subr.mxu0 0.0
        %497 = vmatpush1.msra.mxu0 0.0
        %498 = vmatprep.subr.mxu0 0.0
        %499 = vmatpush1.msra.mxu0 0.0
        %500 = vmatprep.subr.mxu0 0.0
        %501 = vmatpush1.msra.mxu0 0.0
        %502 = vmatprep.subr.mxu0 0.0
        %503 = vmatpush1.msra.mxu0 0.0
        %504 = vmatprep.subr.mxu0 0.0
        %505 = vmatpush1.msra.mxu0 0.0
        %506 = vmatprep.subr.mxu0 0.0
        %507 = vmatpush1.msra.mxu0 0.0
        %508 = vmatprep.subr.mxu0 0.0
        %509 = vmatpush1.msra.mxu0 0.0
        %510 = vmatprep.subr.mxu0 0.0
        %511 = vmatpush1.msra.mxu0 0.0
        %512 = vmatprep.subr.mxu0 %v479
        %513 = vmatpush1.msra.mxu0 %v478
        %514 = vmatprep.subr.mxu0 %v477
        %515 = vmatpush1.msra.mxu0 %v476
        %516 = vmatprep.subr.mxu0 0.0
        %517 = vmatpush2.msra.mxu0 0.0
        %518 = vmatprep.subr.mxu0 0.0
        %519 = vmatpush2.msra.mxu0 0.0
        %520 = vmatprep.subr.mxu0 0.0
        %521 = vmatpush2.msra.mxu0 0.0
        %522 = vmatprep.subr.mxu0 0.0
        %523 = vmatpush2.msra.mxu0 0.0
        %524 = vmatprep.subr.mxu0 0.0
        %525 = vmatpush2.msra.mxu0 0.0
        %526 = vmatprep.subr.mxu0 0.0
        %527 = vmatpush2.msra.mxu0 0.0
        %528 = vmatprep.subr.mxu0 0.0
        %529 = vmatpush2.msra.mxu0 0.0
        %530 = vmatprep.subr.mxu0 0.0
        %531 = vmatpush2.msra.mxu0 0.0
        %532 = vmatprep.subr.mxu0 0.0
        %533 = vmatpush2.msra.mxu0 0.0
        %534 = vmatprep.subr.mxu0 0.0
        %535 = vmatpush2.msra.mxu0 0.0
        %536 = vmatprep.subr.mxu0 0.0
        %537 = vmatpush2.msra.mxu0 0.0
        %538 = vmatprep.subr.mxu0 0.0
        %539 = vmatpush2.msra.mxu0 0.0
        %540 = vmatprep.subr.mxu0 0.0
        %541 = vmatpush2.msra.mxu0 0.0
        %542 = vmatprep.subr.mxu0 0.0
        %543 = vmatpush2.msra.mxu0 0.0
        %544 = vmatprep.subr.mxu0 0.0
        %545 = vmatpush2.msra.mxu0 0.0
        %546 = vmatprep.subr.mxu0 0.0
        %547 = vmatpush2.msra.mxu0 0.0
        %548 = vmatprep.mubr.f32.mxu0 0.0
        %549 = vmatmul.mubr.f32.gmra.mxu0 %v482
        %v550 = vpop.f32.mrf.mxu0
        %v551 = vadd.f32 0.0, %v550
        %v552 = vpop.f32.mrf.mxu0
        %v553 = vadd.f32 0.0, %v552
        %554 = vdwg.mxu0
        %v555 = vadd.f32 %v472, %v551
        %v556 = vadd.f32 %v474, %v553
        %v558 = vlaneseq
        %v559 = vshrl.u32 %v558, 7
        %v560 = vsub.s32 0, %v559
        %v561 = vrot.slane %v311, %v560
        %v562 = vlaneseq
        %v563 = vshrl.u32 %v562, 7
        %v564 = vsub.s32 1, %v563
        %v565 = vrot.slane %v311, %v564
        %v568 = vadd.f32 %v555, %v561
        %v569 = vadd.f32 %v556, %v565
        %v570 = vlaneseq
        %v571 = vand.u32 %v570, 127
        %v572 = vadd.s32 %v571, 128
        %vm573 = vcmp.lt.s32.totalorder %v571, 128
        %vm574 = vcmp.lt.s32.totalorder %v572, 128
        %v575 = vsel %vm573, %v568, 0.0
        %v576 = vsel %vm574, %v569, 0.0
        %v577 = vsub.f32 %v568, %v575
        %v578 = vsub.f32 %v569, %v576
        %v579 = vadd.f32 %v575, %v576
        %580 = vadd.xlane.f32.xlu0 %v579
        %v581 = vpop.xlane.xlu0 %580
        %v582 = vadd.f32 %v577, %v578
        %583 = vadd.xlane.f32.xlu0 %v582
        %v584 = vpop.xlane.xlu0 %583
        %v585 = vmul.f32 %v575, %v575
        %v586 = vmul.f32 %v576, %v576
        %v587 = vadd.f32 %v585, %v586
        %588 = vadd.xlane.f32.xlu0 %v587
        %v589 = vpop.xlane.xlu0 %588
        %v590 = vmul.f32 %v577, %v577
        %v591 = vmul.f32 %v578, %v578
        %v592 = vadd.f32 %v590, %v591
        %593 = vadd.xlane.f32.xlu0 %v592
        %v594 = vpop.xlane.xlu0 %593
        %v595 = vmul.f32 %v581, 0.03125
        %v596 = vmul.f32 %v584, 0.03125
        %v597 = vmul.f32 %v589, 0.03125
        %v598 = vmul.f32 %v595, %v595
        %v599 = vsub.f32 %v597, %v598
        %v600 = vadd.f32 %v599, 1e-05
        %v601 = vrsqrt.pop %v600
        %v602 = vmul.f32 %v594, 0.03125
        %v603 = vmul.f32 %v596, %v596
        %v604 = vsub.f32 %v602, %v603
        %v605 = vadd.f32 %v604, 1e-05
        %v606 = vrsqrt.pop %v605
        %v607 = vsel %vm573, %v595, %v596
        %v608 = vsel %vm574, %v595, %v596
        %v609 = vsel %vm573, %v601, %v606
        %v610 = vsel %vm574, %v601, %v606
        %v611 = vsub.f32 %v568, %v607
        %v612 = vsub.f32 %v569, %v608
        %v613 = vmul.f32 %v611, %v609
        %v614 = vmul.f32 %v612, %v610
        %v616 = vlaneseq
        %v617 = vshrl.u32 %v616, 7
        %v618 = vsub.s32 0, %v617
        %v619 = vrot.slane %v313, %v618
        %v620 = vlaneseq
        %v621 = vshrl.u32 %v620, 7
        %v622 = vsub.s32 1, %v621
        %v623 = vrot.slane %v313, %v622
        %v626 = vmul.f32 %v613, %v619
        %v627 = vmul.f32 %v614, %v623
        %v629 = vlaneseq
        %v630 = vshrl.u32 %v629, 7
        %v631 = vsub.s32 0, %v630
        %v632 = vrot.slane %v315, %v631
        %v633 = vlaneseq
        %v634 = vshrl.u32 %v633, 7
        %v635 = vsub.s32 1, %v634
        %v636 = vrot.slane %v315, %v635
        %v639 = vadd.f32 %v626, %v632
        %v640 = vadd.f32 %v627, %v636
        %v641 = vld [vmem:[#allocation5] sm:$0xff]
        %v642 = vld [vmem:[#allocation5 + $0x8] sm:$0xff]
        %v643 = vld [vmem:[#allocation5 + $0x10] sm:$0xff]
        %v644 = vld [vmem:[#allocation5 + $0x18] sm:$0xff]
        %v645 = vld [vmem:[#allocation5 + $0x20] sm:$0xff]
        %v646 = vld [vmem:[#allocation5 + $0x28] sm:$0xff]
        %v647 = vld [vmem:[#allocation5 + $0x30] sm:$0xff]
        %v648 = vld [vmem:[#allocation5 + $0x38] sm:$0xff]
        %v649 = vld [vmem:[#allocation5 + $0x40] sm:$0xff]
        %v650 = vld [vmem:[#allocation5 + $0x48] sm:$0xff]
        %v651 = vld [vmem:[#allocation5 + $0x50] sm:$0xff]
        %v652 = vld [vmem:[#allocation5 + $0x58] sm:$0xff]
        %v653 = vld [vmem:[#allocation5 + $0x60] sm:$0xff]
        %v654 = vld [vmem:[#allocation5 + $0x68] sm:$0xff]
        %v655 = vld [vmem:[#allocation5 + $0x70] sm:$0xff]
        %v656 = vld [vmem:[#allocation5 + $0x78] sm:$0xff]
        %v657 = vld [vmem:[#allocation5 + $0x80] sm:$0xff]
        %v658 = vld [vmem:[#allocation5 + $0x88] sm:$0xff]
        %v659 = vld [vmem:[#allocation5 + $0x90] sm:$0xff]
        %v660 = vld [vmem:[#allocation5 + $0x98] sm:$0xff]
        %v661 = vld [vmem:[#allocation5 + $0xa0] sm:$0xff]
        %v662 = vld [vmem:[#allocation5 + $0xa8] sm:$0xff]
        %v663 = vld [vmem:[#allocation5 + $0xb0] sm:$0xff]
        %v664 = vld [vmem:[#allocation5 + $0xb8] sm:$0xff]
        %v665 = vld [vmem:[#allocation5 + $0xc0] sm:$0xff]
        %v666 = vld [vmem:[#allocation5 + $0xc8] sm:$0xff]
        %v667 = vld [vmem:[#allocation5 + $0xd0] sm:$0xff]
        %v668 = vld [vmem:[#allocation5 + $0xd8] sm:$0xff]
        %v669 = vld [vmem:[#allocation5 + $0xe0] sm:$0xff]
        %v670 = vld [vmem:[#allocation5 + $0xe8] sm:$0xff]
        %v671 = vld [vmem:[#allocation5 + $0xf0] sm:$0xff]
        %v672 = vld [vmem:[#allocation5 + $0xf8] sm:$0xff]
        %673 = vmatprep.subr.mxu0 0.0
        %674 = vmatpush1.msra.mxu0 %v656
        %675 = vmatprep.subr.mxu0 0.0
        %676 = vmatpush1.msra.mxu0 %v655
        %677 = vmatprep.subr.mxu0 0.0
        %678 = vmatpush1.msra.mxu0 %v654
        %679 = vmatprep.subr.mxu0 0.0
        %680 = vmatpush1.msra.mxu0 %v653
        %681 = vmatprep.subr.mxu0 0.0
        %682 = vmatpush1.msra.mxu0 %v652
        %683 = vmatprep.subr.mxu0 0.0
        %684 = vmatpush1.msra.mxu0 %v651
        %685 = vmatprep.subr.mxu0 0.0
        %686 = vmatpush1.msra.mxu0 %v650
        %687 = vmatprep.subr.mxu0 0.0
        %688 = vmatpush1.msra.mxu0 %v649
        %689 = vmatprep.subr.mxu0 0.0
        %690 = vmatpush1.msra.mxu0 %v648
        %691 = vmatprep.subr.mxu0 0.0
        %692 = vmatpush1.msra.mxu0 %v647
        %693 = vmatprep.subr.mxu0 0.0
        %694 = vmatpush1.msra.mxu0 %v646
        %695 = vmatprep.subr.mxu0 0.0
        %696 = vmatpush1.msra.mxu0 %v645
        %697 = vmatprep.subr.mxu0 0.0
        %698 = vmatpush1.msra.mxu0 %v644
        %699 = vmatprep.subr.mxu0 0.0
        %700 = vmatpush1.msra.mxu0 %v643
        %701 = vmatprep.subr.mxu0 0.0
        %702 = vmatpush1.msra.mxu0 %v642
        %703 = vmatprep.subr.mxu0 0.0
        %704 = vmatpush1.msra.mxu0 %v641
        %705 = vmatprep.subr.mxu0 0.0
        %706 = vmatpush2.msra.mxu0 %v672
        %707 = vmatprep.subr.mxu0 0.0
        %708 = vmatpush2.msra.mxu0 %v671
        %709 = vmatprep.subr.mxu0 0.0
        %710 = vmatpush2.msra.mxu0 %v670
        %711 = vmatprep.subr.mxu0 0.0
        %712 = vmatpush2.msra.mxu0 %v669
        %713 = vmatprep.subr.mxu0 0.0
        %714 = vmatpush2.msra.mxu0 %v668
        %715 = vmatprep.subr.mxu0 0.0
        %716 = vmatpush2.msra.mxu0 %v667
        %717 = vmatprep.subr.mxu0 0.0
        %718 = vmatpush2.msra.mxu0 %v666
        %719 = vmatprep.subr.mxu0 0.0
        %720 = vmatpush2.msra.mxu0 %v665
        %721 = vmatprep.subr.mxu0 0.0
        %722 = vmatpush2.msra.mxu0 %v664
        %723 = vmatprep.subr.mxu0 0.0
        %724 = vmatpush2.msra.mxu0 %v663
        %725 = vmatprep.subr.mxu0 0.0
        %726 = vmatpush2.msra.mxu0 %v662
        %727 = vmatprep.subr.mxu0 0.0
        %728 = vmatpush2.msra.mxu0 %v661
        %729 = vmatprep.subr.mxu0 0.0
        %730 = vmatpush2.msra.mxu0 %v660
        %731 = vmatprep.subr.mxu0 0.0
        %732 = vmatpush2.msra.mxu0 %v659
        %733 = vmatprep.subr.mxu0 0.0
        %734 = vmatpush2.msra.mxu0 %v658
        %735 = vmatprep.subr.mxu0 0.0
        %736 = vmatpush2.msra.mxu0 %v657
        %737 = vmatprep.mubr.f32.mxu0 %v640
        %738 = vmatmul.mubr.f32.gmra.mxu0 %v639
        %v739 = vpop.f32.mrf.mxu0
        %v740 = vadd.f32 %v316, %v739
        %v741 = vpop.f32.mrf.mxu0
        %742 = vdwg.mxu0
        %743 = vst.msk [vmem:[%s298] sm:$0xff] %vm480, %v740
        %s744 = sand.u32 %s171, 1
        %s745 = scalar_lea.sflag [#allocation4], %s744
        %s746 = sand.u32 %s171, 1
        %s747 = smul.addr %s746, 8
        %s748 = scalar_lea.vmem [#allocation7], %s747
        // Predicated region
        $region53: #{cross_attention_forward.1} parent=43 // pred_check
          %p749 = pneg %p181
        $region54: #{cross_attention_forward.1} parent=43 // pred_check_branch
          %751 = sbr.rel (%p749) target = $region56
        $region55: #{cross_attention_forward.1} parent=43 // pred_region
          %s753 = ssub.s32 128, 128
          %754 = vsyncadd %s745, %s753
          %s755 = smul.addr %s22, 128
          %s756 = scalar_lea.hbm %s6, %s755
          %s758 = sshll.u32 %s748, 4
          %s759 = int_to_ptr.vmem [resolvable:$true] %s758
          %761 = dma.vmem_to_hbm [thread:$0]  %s759, 128, %s756, %s745
        $region56: #{cross_attention_forward.1} parent=43 // pred_fallthru
          _
      $region44: #{cross_attention_forward.1} parent=5 // pred_fallthru
        _
      %p762 = scmp.le.s32.totalorder 2, %s17
      // Predicated region
      $region57: #{cross_attention_forward.1} parent=5 // pred_check
        %p763 = pneg %p762
      $region58: #{cross_attention_forward.1} parent=5 // pred_check_branch
        %765 = sbr.rel (%p763) target = $region60
      $region59: #{cross_attention_forward.1} parent=5 // pred_region
        %s766 = ssub.s32 %s17, 2
        // Predicated region
        $region61: #{cross_attention_forward.1} parent=59 // pred_check
          %p767 = pneg %p187
        $region62: #{cross_attention_forward.1} parent=59 // pred_check_branch
          %769 = sbr.rel (%p767) target = $region64
        $region63: #{cross_attention_forward.1} parent=59 // pred_region
          %s770 = sand.u32 %s172, 1
          %s771 = scalar_lea.sflag [#allocation4], %s770
          %s772 = sand.u32 %s172, 1
          %s773 = smul.addr %s772, 8
          %s774 = scalar_lea.vmem [#allocation7], %s773
          %775 = dma.done %s771, 128
        $region64: #{cross_attention_forward.1} parent=59 // pred_fallthru
          _
      $region60: #{cross_attention_forward.1} parent=5 // pred_fallthru
        _
    $region6: #{cross_attention_forward.1} parent=1 // loop_footer
      %s21 = sadd.s32 1, %s17
    $region7: #{cross_attention_forward.1} parent=1 // loop_footer_branch
      %16 = sbr.rel target = $region3
    $region8: #{cross_attention_forward.1} parent=1 // loop_exit
      _
    %776 = vsyncpa [#allocation3], 1
    %s777 = scalar_lea.sflag [#allocation3], 1
    %778 = vsyncpa %s777, 1
    %779 = vsyncpa [#allocation6], 1
    %780 = vsyncpa [#allocation4], 1
    %s781 = scalar_lea.sflag [#allocation4], 1
    %782 = vsyncpa %s781, 1

</llo_original>
